<compile_context>
chip_gen: v7x
topology: tpu7x:2x2x1
jax: 0.10.0
libtpu: 0.0.40
codegen_flags: <defaults>
</compile_context>

<pallas_src>
import jax
import jax.numpy as jnp
from jax.experimental import pallas as pl
from jax.experimental.pallas import tpu as pltpu

_LANE = 128
# Per-buffer block cap: with input + output each double-buffered this stays
# around 8 MiB, well inside the scoped-VMEM default on every generation
# (16 MiB v5e, 32 MiB v6e/v7x; v7x has only 64 MiB physical VMEM).
_MAX_BLOCK_BYTES = 2 * 1024 * 1024


def _sublanes(dtype) -> int:
    # One vreg packs 8 sublanes of 32-bit; sub-32-bit dtypes pack along sublanes.
    return max(8, 32 // jnp.dtype(dtype).itemsize)


def _relu_kernel(x_ref, o_ref):
    # Scalar zero of the ref dtype: no promotion, no materialized zeros tensor.
    o_ref[...] = jnp.maximum(x_ref[...], jnp.zeros((), x_ref.dtype))


def _cost(n: int, itemsize: int) -> pl.CostEstimate:
    return pl.CostEstimate(flops=n, transcendentals=0,
                           bytes_accessed=2 * n * itemsize)


@jax.jit
def relu_pallas(x: jax.Array) -> jax.Array:
    """Elementwise ReLU matching torch.nn.functional.relu semantics."""
    orig_shape = x.shape
    dtype = x.dtype
    itemsize = jnp.dtype(dtype).itemsize
    n = x.size
    sub = _sublanes(dtype)
    vreg = sub * _LANE

    if n == 0:
        return x

    if n % vreg == 0:
        # Fast path: lane-dense (sub, n // sub) slab. The reshape is a pure
        # row-major bitcast (no padding, no copies) and stores are full-width
        # unmasked vst.
        cols = n // sub
        x2d = x.reshape(sub, cols)

        if n * itemsize <= _MAX_BLOCK_BYTES:
            # Whole array as a single block: no grid, no per-step overhead.
            out2d = pl.pallas_call(
                _relu_kernel,
                out_shape=jax.ShapeDtypeStruct(x2d.shape, dtype),
                in_specs=[pl.BlockSpec(x2d.shape, lambda: (0, 0))],
                out_specs=pl.BlockSpec(x2d.shape, lambda: (0, 0)),
                cost_estimate=_cost(n, itemsize),
            )(x2d)
        else:
            # Large input: tile along the lane axis with ~2 MiB lane-dense
            # blocks so HBM<->VMEM is pipelined; "parallel" lets v7x's two
            # TensorCores split the grid.
            block_cols = (_MAX_BLOCK_BYTES // (sub * itemsize)) // _LANE * _LANE
            block_cols = min(block_cols, cols)
            out2d = pl.pallas_call(
                _relu_kernel,
                out_shape=jax.ShapeDtypeStruct(x2d.shape, dtype),
                grid=(pl.cdiv(cols, block_cols),),
                in_specs=[pl.BlockSpec((sub, block_cols), lambda i: (0, i))],
                out_specs=pl.BlockSpec((sub, block_cols), lambda i: (0, i)),
                compiler_params=pltpu.CompilerParams(
                    dimension_semantics=("parallel",),
                    vmem_limit_bytes=32 * 1024 * 1024,
                ),
                cost_estimate=_cost(n, itemsize),
            )(x2d)
        return out2d.reshape(orig_shape)

    # Ragged fallback (size not a multiple of sub*128): NO host-side pad/slice
    # copies.  Small arrays run as one full-array 1-D block (full-extent blocks
    # waive the 128-lane divisibility rule); large arrays use a 1-D grid whose
    # partial last block is masked by Pallas.
    x1d = x.reshape(-1)
    if n * itemsize <= _MAX_BLOCK_BYTES:
        out1d = pl.pallas_call(
            _relu_kernel,
            out_shape=jax.ShapeDtypeStruct((n,), dtype),
            in_specs=[pl.BlockSpec((n,), lambda: (0,))],
            out_specs=pl.BlockSpec((n,), lambda: (0,)),
            cost_estimate=_cost(n, itemsize),
        )(x1d)
    else:
        block = (_MAX_BLOCK_BYTES // itemsize) // vreg * vreg
        out1d = pl.pallas_call(
            _relu_kernel,
            out_shape=jax.ShapeDtypeStruct((n,), dtype),
            grid=(pl.cdiv(n, block),),
            in_specs=[pl.BlockSpec((block,), lambda i: (i,))],
            out_specs=pl.BlockSpec((block,), lambda i: (i,)),
            compiler_params=pltpu.CompilerParams(
                dimension_semantics=("parallel",),
                vmem_limit_bytes=32 * 1024 * 1024,
            ),
            cost_estimate=_cost(n, itemsize),
        )(x1d)
    return out1d.reshape(orig_shape)


if __name__ == "__main__":
    key = jax.random.PRNGKey(0)
    # Shape implied by the module's forward: x147 = randn([1, 192, 12, 12]).
    x = jax.random.normal(key, (1, 192, 12, 12), dtype=jnp.float32)

    out = relu_pallas(x)
    out = jax.block_until_ready(out)

    # Correctness check against pure-JAX reference.
    ref = jnp.maximum(x, 0.0)
    assert out.shape == x.shape and out.dtype == x.dtype
    assert bool(jnp.allclose(out, ref)), "mismatch vs reference ReLU"

    print("KERNEL_OK")
</pallas_src>

<mosaic_0001>
module attributes {stable_mosaic.version = 11 : i64} {
  func.func @_relu_kernel(%arg0: memref<8x3456xf32, #tpu.memory_space<vmem>>, %arg1: memref<8x3456xf32, #tpu.memory_space<vmem>>) attributes {dimension_semantics = [], scalar_prefetch = 0 : i64, scratch_operands = 0 : i64, tpu.core_type = #tpu.core_type<tc>} {
    %c0 = arith.constant 0 : index
    %c0_0 = arith.constant 0 : index
    %0 = vector.load %arg0[%c0, %c0_0] : memref<8x3456xf32, #tpu.memory_space<vmem>>, vector<8x3456xf32>
    %cst = arith.constant 0.000000e+00 : f32
    %1 = vector.broadcast %cst : f32 to vector<8x3456xf32>
    %2 = arith.maximumf %0, %1 : vector<8x3456xf32>
    %c0_1 = arith.constant 0 : index
    %c0_2 = arith.constant 0 : index
    %3 = vector.load %arg1[%c0_1, %c0_2] : memref<8x3456xf32, #tpu.memory_space<vmem>>, vector<8x3456xf32>
    tpu.vector_store %arg1[%c0_1, %c0_2], %2 {strides = array<i32>} : memref<8x3456xf32, #tpu.memory_space<vmem>>, vector<8x3456xf32>,
    return
  }
}

</mosaic_0001>

<llo_original>
// kernel: relu_pallas.1
$region0: #{relu_pallas.1}
  #allocation0 [shape = 'u32[]', space=smem, size = 0x4, offset = 0x4, fixed_abs, tag = 'smem constant byte address 0x4 - core index']
  #allocation1 [shape = 'u32[144,128]{1,0:T(1,128)}', space=vmem, size = 0x12000, scoped, tag = 'internal scratch']
  %s0 = inlined_call_operand.vmem [shape: f32[8,3456], index: 0, kind: input, shape index: {}]
  %s1 = inlined_call_operand.vmem [shape: f32[8,3456], index: 1, kind: output, shape index: {}]
  %s2 = sld [smem:[#allocation0]]
  $region14: #{relu_pallas.1} parent=0
    _
  %s4 = ssub.s32 1, %s2
  %s5 = scalar_select 0, %s4, %s2
  // Predicated region
  $region2: #{relu_pallas.1} parent=0 // pred_check
    _
  $region3: #{relu_pallas.1} parent=0 // pred_check_branch
    %7 = sbr.rel (0) target = $region5
  $region4: #{relu_pallas.1} parent=0 // pred_region
    _
  $region5: #{relu_pallas.1} parent=0 // pred_fallthru
    _
  %v8 = vld [vmem:[%s0] sm:$0xff]
  %v9 = vld [vmem:[%s0 + $0x8] sm:$0xff]
  %v10 = vld [vmem:[%s0 + $0x10] sm:$0xff]
  %v11 = vld [vmem:[%s0 + $0x18] sm:$0xff]
  %v12 = vld [vmem:[%s0 + $0x20] sm:$0xff]
  %v13 = vld [vmem:[%s0 + $0x28] sm:$0xff]
  %v14 = vld [vmem:[%s0 + $0x30] sm:$0xff]
  %v15 = vld [vmem:[%s0 + $0x38] sm:$0xff]
  %v16 = vld [vmem:[%s0 + $0x40] sm:$0xff]
  %v17 = vld [vmem:[%s0 + $0x48] sm:$0xff]
  %v18 = vld [vmem:[%s0 + $0x50] sm:$0xff]
  %v19 = vld [vmem:[%s0 + $0x58] sm:$0xff]
  %v20 = vld [vmem:[%s0 + $0x60] sm:$0xff]
  %v21 = vld [vmem:[%s0 + $0x68] sm:$0xff]
  %v22 = vld [vmem:[%s0 + $0x70] sm:$0xff]
  %v23 = vld [vmem:[%s0 + $0x78] sm:$0xff]
  %v24 = vld [vmem:[%s0 + $0x80] sm:$0xff]
  %v25 = vld [vmem:[%s0 + $0x88] sm:$0xff]
  %v26 = vld [vmem:[%s0 + $0x90] sm:$0xff]
  %v27 = vld [vmem:[%s0 + $0x98] sm:$0xff]
  %v28 = vld [vmem:[%s0 + $0xa0] sm:$0xff]
  %v29 = vld [vmem:[%s0 + $0xa8] sm:$0xff]
  %v30 = vld [vmem:[%s0 + $0xb0] sm:$0xff]
  %v31 = vld [vmem:[%s0 + $0xb8] sm:$0xff]
  %v32 = vld [vmem:[%s0 + $0xc0] sm:$0xff]
  %v33 = vld [vmem:[%s0 + $0xc8] sm:$0xff]
  %v34 = vld [vmem:[%s0 + $0xd0] sm:$0xff]
  %v35 = vmax.f32 %v8, 0.0
  %v36 = vmax.f32 %v9, 0.0
  %v37 = vmax.f32 %v10, 0.0
  %v38 = vmax.f32 %v11, 0.0
  %v39 = vmax.f32 %v12, 0.0
  %v40 = vmax.f32 %v13, 0.0
  %v41 = vmax.f32 %v14, 0.0
  %v42 = vmax.f32 %v15, 0.0
  %v43 = vmax.f32 %v16, 0.0
  %v44 = vmax.f32 %v17, 0.0
  %v45 = vmax.f32 %v18, 0.0
  %v46 = vmax.f32 %v19, 0.0
  %v47 = vmax.f32 %v20, 0.0
  %v48 = vmax.f32 %v21, 0.0
  %v49 = vmax.f32 %v22, 0.0
  %v50 = vmax.f32 %v23, 0.0
  %v51 = vmax.f32 %v24, 0.0
  %v52 = vmax.f32 %v25, 0.0
  %v53 = vmax.f32 %v26, 0.0
  %v54 = vmax.f32 %v27, 0.0
  %v55 = vmax.f32 %v28, 0.0
  %v56 = vmax.f32 %v29, 0.0
  %v57 = vmax.f32 %v30, 0.0
  %v58 = vmax.f32 %v31, 0.0
  %v59 = vmax.f32 %v32, 0.0
  %v60 = vmax.f32 %v33, 0.0
  %v61 = vmax.f32 %v34, 0.0
  %62 = vst [vmem:[%s1] sm:$0xff] %v35
  %63 = vst [vmem:[%s1 + $0x8] sm:$0xff] %v36
  %64 = vst [vmem:[%s1 + $0x10] sm:$0xff] %v37
  %65 = vst [vmem:[%s1 + $0x18] sm:$0xff] %v38
  %66 = vst [vmem:[%s1 + $0x20] sm:$0xff] %v39
  %67 = vst [vmem:[%s1 + $0x28] sm:$0xff] %v40
  %68 = vst [vmem:[%s1 + $0x30] sm:$0xff] %v41
  %69 = vst [vmem:[%s1 + $0x38] sm:$0xff] %v42
  %70 = vst [vmem:[%s1 + $0x40] sm:$0xff] %v43
  %71 = vst [vmem:[%s1 + $0x48] sm:$0xff] %v44
  %72 = vst [vmem:[%s1 + $0x50] sm:$0xff] %v45
  %73 = vst [vmem:[%s1 + $0x58] sm:$0xff] %v46
  %74 = vst [vmem:[%s1 + $0x60] sm:$0xff] %v47
  %75 = vst [vmem:[%s1 + $0x68] sm:$0xff] %v48
  %76 = vst [vmem:[%s1 + $0x70] sm:$0xff] %v49
  %77 = vst [vmem:[%s1 + $0x78] sm:$0xff] %v50
  %78 = vst [vmem:[%s1 + $0x80] sm:$0xff] %v51
  %79 = vst [vmem:[%s1 + $0x88] sm:$0xff] %v52
  %80 = vst [vmem:[%s1 + $0x90] sm:$0xff] %v53
  %81 = vst [vmem:[%s1 + $0x98] sm:$0xff] %v54
  %82 = vst [vmem:[%s1 + $0xa0] sm:$0xff] %v55
  %83 = vst [vmem:[%s1 + $0xa8] sm:$0xff] %v56
  %84 = vst [vmem:[%s1 + $0xb0] sm:$0xff] %v57
  %85 = vst [vmem:[%s1 + $0xb8] sm:$0xff] %v58
  %86 = vst [vmem:[%s1 + $0xc0] sm:$0xff] %v59
  %87 = vst [vmem:[%s1 + $0xc8] sm:$0xff] %v60
  %88 = vst [vmem:[%s1 + $0xd0] sm:$0xff] %v61
  // Predicated region
  $region6: #{relu_pallas.1} parent=0 // pred_check
    _
  $region7: #{relu_pallas.1} parent=0 // pred_check_branch
    %90 = sbr.rel (0) target = $region9
  $region8: #{relu_pallas.1} parent=0 // pred_region
    _
  $region9: #{relu_pallas.1} parent=0 // pred_fallthru
    _
  // Predicated region
  $region10: #{relu_pallas.1} parent=0 // pred_check
    _
  $region11: #{relu_pallas.1} parent=0 // pred_check_branch
    %92 = sbr.rel (0) target = $region13
  $region12: #{relu_pallas.1} parent=0 // pred_region
    _
  $region13: #{relu_pallas.1} parent=0 // pred_fallthru
    _

</llo_original>
